<compile_context>
chip_gen: v7x
topology: tpu7x:2x2x1
jax: 0.10.0
libtpu: 0.0.40
codegen_flags: <defaults>
</compile_context>

<pallas_src>
import jax
import jax.numpy as jnp
from jax.experimental import pallas as pl
from jax.experimental.pallas import tpu as pltpu


def _round_up(a, b):
    return (a + b - 1) // b * b


def _device_kind():
    try:
        return jax.devices()[0].device_kind.lower()
    except Exception:  # pragma: no cover - defensive, e.g. no devices visible
        return ""


def _disc_kernel(h_ref, x_ref, o_ref):
    # (1, H) . (tile_n, H)^T -> (1, tile_n): MXU transposed-RHS contraction,
    # f32 accumulation, lane-dense output block.
    o_ref[...] = jax.lax.dot_general(
        h_ref[...], x_ref[...],
        dimension_numbers=(((1,), (1,)), ((), ())),
        preferred_element_type=jnp.float32,
    ).astype(o_ref.dtype)


def discriminator_forward(x, summary, weight, *, tile_n=None):
    """x: (N, H), summary: (H,) or (1, H), weight: (H, H) -> (N,)"""
    N, H = x.shape
    if summary.ndim == 1:
        summary = summary[None, :]  # (1, H)

    # Hoist the tiny summary@weight matmul out of the grid (plain XLA op).
    h = jnp.dot(summary.astype(jnp.float32), weight.astype(jnp.float32))  # (1, H)
    h = h.astype(x.dtype)  # bf16 x -> bf16 h -> native MXU bf16 path

    kind = _device_kind()
    itemsize = jnp.dtype(x.dtype).itemsize
    row_bytes = H * itemsize

    # Byte-targeted row tile (multiple of 128 for a lane-dense output block).
    # v5e's default scoped VMEM is 16 MiB -> keep the double-buffered x stream
    # comfortably under it; v6e/v7x get a larger block.
    if tile_n is None:
        target_block_bytes = (6 << 20) if "v5" in kind else (8 << 20)
        tile_n = max(128, (target_block_bytes // max(row_bytes, 1)) // 128 * 128)
        tile_n = min(tile_n, _round_up(N, 128))  # never bigger than needed
    assert tile_n % 128 == 0, "tile_n must be a multiple of 128 (lane-dense output)"

    grid_steps = pl.cdiv(N, tile_n)  # partial last block handled by Pallas (no pad)
    x_block_bytes = tile_n * row_bytes

    # Deepen the input pipeline only when tile growth is capped (small blocks,
    # multi-step grid): DMA issue latency would otherwise be exposed.
    if x_block_bytes < (1 << 20) and grid_steps >= 2:
        x_spec = pl.BlockSpec((tile_n, H), lambda i: (i, 0),
                              pipeline_mode=pl.Buffered(3))
    else:
        x_spec = pl.BlockSpec((tile_n, H), lambda i: (i, 0))

    # v7x: 2 TensorCores per chip, each with its own HBM stream -> split the N
    # axis across cores.  Other generations: plain parallel semantics.
    if "v7" in kind or "7x" in kind:
        dim_sem = (pltpu.CORE_PARALLEL,)
    else:
        dim_sem = (pltpu.PARALLEL,)

    cost = pl.CostEstimate(
        flops=2 * N * H,
        transcendentals=0,
        bytes_accessed=int(N * row_bytes + row_bytes + N * 4),
    )

    out = pl.pallas_call(
        _disc_kernel,
        out_shape=jax.ShapeDtypeStruct((1, N), jnp.float32),
        grid_spec=pltpu.PrefetchScalarGridSpec(
            num_scalar_prefetch=0,
            grid=(grid_steps,),
            in_specs=[
                pl.BlockSpec((1, H), lambda i: (0, 0)),  # h (resident, tiny)
                x_spec,                                   # x (streamed)
            ],
            out_specs=pl.BlockSpec((1, tile_n), lambda i: (0, i)),
        ),
        compiler_params=pltpu.CompilerParams(
            dimension_semantics=dim_sem,
            vmem_limit_bytes=32 << 20,  # explicit; safe on v5e/v6e/v7x
        ),
        cost_estimate=cost,
    )(h, x)

    # f32 accumulation inside the kernel; cast to the promoted input dtype.
    return out[0].astype(jnp.promote_types(x.dtype, weight.dtype))


def init_discriminator_weight(key, hidden_dim, dtype=jnp.float32):
    # torch_geometric `uniform(size, tensor)`: U(-1/sqrt(size), 1/sqrt(size))
    bound = 1.0 / jnp.sqrt(jnp.asarray(hidden_dim, dtype=jnp.float32))
    return jax.random.uniform(
        key, (hidden_dim, hidden_dim), dtype=dtype, minval=-bound, maxval=bound)


if __name__ == "__main__":
    key = jax.random.PRNGKey(0)
    k_w, k_x, k_s, k_x2 = jax.random.split(key, 4)

    # Small test (H=32, N=8) — single (partial) tile, masked output write.
    N, H = 8, 32
    weight = init_discriminator_weight(k_w, H)
    x = jax.random.normal(k_x, (N, H), dtype=jnp.float32)
    summary = jax.random.normal(k_s, (H,), dtype=jnp.float32)

    out = jax.block_until_ready(discriminator_forward(x, summary, weight))
    ref = jnp.sum(x * (summary @ weight)[None, :], axis=1)
    assert out.shape == (N,)
    assert jnp.allclose(out, ref, atol=1e-5, rtol=1e-5), (out, ref)

    # Ragged N with a multi-step grid: exercises the no-pad partial last block
    # and the deepened (Buffered) input pipeline for small tiles.
    N2 = 300
    x2 = jax.random.normal(k_x2, (N2, H), dtype=jnp.float32)
    out2 = jax.block_until_ready(
        discriminator_forward(x2, summary, weight, tile_n=128))
    ref2 = jnp.sum(x2 * (summary @ weight)[None, :], axis=1)
    assert out2.shape == (N2,)
    assert jnp.allclose(out2, ref2, atol=1e-5, rtol=1e-5)

    print("KERNEL_OK")
</pallas_src>

<mosaic_0001>
module attributes {stable_mosaic.version = 11 : i64} {
  func.func @_disc_kernel(%arg0: i32, %arg1: memref<1x32xf32, #tpu.memory_space<vmem>>, %arg2: memref<128x32xf32, #tpu.memory_space<vmem>>, %arg3: memref<1x128xf32, #tpu.memory_space<vmem>>) attributes {dimension_semantics = [#tpu.dimension_semantics<parallel>], iteration_bounds = array<i64: 1>, scalar_prefetch = 0 : i64, scratch_operands = 0 : i64, tpu.core_type = #tpu.core_type<tc>, window_params = [{pipeline_mode = #tpu.pipeline_mode<synchronous>, transform_indices = @transform_0, window_bounds = array<i64: 1, 32>}, {transform_indices = @transform_1, window_bounds = array<i64: 128, 32>}, {transform_indices = @transform_2, window_bounds = array<i64: 1, 128>}]} {
    %c0 = arith.constant 0 : index
    %c0_0 = arith.constant 0 : index
    %0 = vector.load %arg1[%c0, %c0_0] : memref<1x32xf32, #tpu.memory_space<vmem>>, vector<1x32xf32>
    %c0_1 = arith.constant 0 : index
    %c0_2 = arith.constant 0 : index
    %1 = vector.load %arg2[%c0_1, %c0_2] : memref<128x32xf32, #tpu.memory_space<vmem>>, vector<128x32xf32>
    %cst = arith.constant dense<0.000000e+00> : vector<1x128xf32>
    %2 = tpu.matmul %0, %1, %cst {dimension_numbers = #tpu.dot_dimension_numbers<[1], [1], [0], [0], [0, 0, 1, 0], [], []>} : vector<1x32xf32>, vector<128x32xf32>, vector<1x128xf32> -> vector<1x128xf32>
    %c0_3 = arith.constant 0 : index
    %c0_4 = arith.constant 0 : index
    %3 = vector.load %arg3[%c0_3, %c0_4] : memref<1x128xf32, #tpu.memory_space<vmem>>, vector<1x128xf32>
    tpu.vector_store %arg3[%c0_3, %c0_4], %2 {strides = array<i32>} : memref<1x128xf32, #tpu.memory_space<vmem>>, vector<1x128xf32>,
    return
  }
  func.func @transform_0(%arg0: i32) -> (i32, i32) {
    %c0_i32 = arith.constant 0 : i32
    %c0_i32_0 = arith.constant 0 : i32
    %c0_i32_1 = arith.constant 0 : i32
    return %c0_i32, %c0_i32_0 : i32, i32
  }
  func.func @transform_1(%arg0: i32) -> (i32, i32) {
    %c0_i32 = arith.constant 0 : i32
    %c0_i32_0 = arith.constant 0 : i32
    return %arg0, %c0_i32 : i32, i32
  }
  func.func @transform_2(%arg0: i32) -> (i32, i32) {
    %c0_i32 = arith.constant 0 : i32
    %c0_i32_0 = arith.constant 0 : i32
    return %c0_i32, %arg0 : i32, i32
  }
}

</mosaic_0001>

<llo_original>
// kernel: tpu_custom_call.1
$region0: #{tpu_custom_call.1}
  #allocation0 [shape = 'u32[]', space=smem, size = 0x4, offset = 0x4, fixed_abs, tag = 'smem constant byte address 0x4 - core index']
  #allocation1 [shape = 'u32[144,128]{1,0:T(1,128)}', space=vmem, size = 0x12000, scoped, tag = 'internal scratch']
  %s0 = inlined_call_operand.hbm [shape: f32[1,32], index: 0, kind: input, shape index: {}]
  %s1 = inlined_call_operand.hbm [shape: f32[8,32], index: 1, kind: input, shape index: {}]
  %s2 = inlined_call_operand.hbm [shape: f32[1,8], index: 2, kind: output, shape index: {}]
  %s3 = sld [smem:[#allocation0]]
  $region26: #{tpu_custom_call.1} parent=0
    _
  %s5 = ssub.s32 1, %s3
  %s6 = scalar_select 0, %s5, %s3
  $region1: #{tpu_custom_call.1} parent=0
    #allocation2 [shape = 'u8[512]{0}', space=vmem, size = 0x400, scoped, tag = 'input window, operand 0, single buffered']
    #allocation3 [shape = 's32[1]{0}', space=sflag, size = 0x4, scoped, tag = 'scoped memory for tpu_custom_call.1']
    #allocation4 [shape = 's32[1]{0}', space=sflag, size = 0x4, scoped, tag = 'scoped memory for tpu_custom_call.1']
    #allocation5 [shape = 'u8[65536]{0}', space=vmem, size = 0x10000, scoped, tag = 'input window, operand 1, single buffered']
    #allocation6 [shape = 's32[1]{0}', space=sflag, size = 0x4, scoped, tag = 'scoped memory for tpu_custom_call.1']
    #allocation7 [shape = 'u8[512]{0}', space=vmem, size = 0x400, scoped, tag = 'output window, operand 0, single buffered']
    %7 = vsyncpa [#allocation3], 0
    %8 = vsyncpa [#allocation6], 0
    %9 = vsyncpa [#allocation4], 0
    // Predicated region
    $region2: #{tpu_custom_call.1} parent=1 // pred_check
      _
    $region3: #{tpu_custom_call.1} parent=1 // pred_check_branch
      %11 = sbr.rel (0) target = $region5
    $region4: #{tpu_custom_call.1} parent=1 // pred_region
      %s13 = ssub.s32 16, 16
      %14 = vsyncadd [#allocation3], %s13
      %s16 = sshll.u32 [#allocation2], 4
      %s17 = int_to_ptr.vmem [resolvable:$true] %s16
      %19 = dma.hbm_to_vmem [thread:$0]  %s0, 16, %s17, [#allocation3]
    $region5: #{tpu_custom_call.1} parent=1 // pred_fallthru
      _
    // Predicated region
    $region6: #{tpu_custom_call.1} parent=1 // pred_check
      _
    $region7: #{tpu_custom_call.1} parent=1 // pred_check_branch
      %21 = sbr.rel (0) target = $region9
    $region8: #{tpu_custom_call.1} parent=1 // pred_region
      %s23 = ssub.s32 2048, 128
      %24 = vsyncadd [#allocation6], %s23
      %s25 = sshll.u32 [#allocation5], 4
      %s26 = int_to_ptr.vmem [resolvable:$true] %s25
      %31 = dma.hbm_to_vmem [thread:$0]  %s1, 128, %s26, [#allocation6], 128, 128, 8
    $region9: #{tpu_custom_call.1} parent=1 // pred_fallthru
      _
    // Predicated region
    $region10: #{tpu_custom_call.1} parent=1 // pred_check
      _
    $region11: #{tpu_custom_call.1} parent=1 // pred_check_branch
      %33 = sbr.rel (0) target = $region13
    $region12: #{tpu_custom_call.1} parent=1 // pred_region
      %34 = dma.done [#allocation3], 16
    $region13: #{tpu_custom_call.1} parent=1 // pred_fallthru
      _
    // Predicated region
    $region14: #{tpu_custom_call.1} parent=1 // pred_check
      _
    $region15: #{tpu_custom_call.1} parent=1 // pred_check_branch
      %36 = sbr.rel (0) target = $region17
    $region16: #{tpu_custom_call.1} parent=1 // pred_region
      %37 = dma.done [#allocation6], 2048
    $region17: #{tpu_custom_call.1} parent=1 // pred_fallthru
      _
    %v38 = vld [vmem:[#allocation2] sm:$0x1]
    %v39 = vld [vmem:[#allocation5] sm:$0xff]
    %v40 = vld [vmem:[#allocation5 + $0x8] sm:$0xff]
    %v41 = vld [vmem:[#allocation5 + $0x10] sm:$0xff]
    %v42 = vld [vmem:[#allocation5 + $0x18] sm:$0xff]
    %v43 = vld [vmem:[#allocation5 + $0x20] sm:$0xff]
    %v44 = vld [vmem:[#allocation5 + $0x28] sm:$0xff]
    %v45 = vld [vmem:[#allocation5 + $0x30] sm:$0xff]
    %v46 = vld [vmem:[#allocation5 + $0x38] sm:$0xff]
    %v47 = vld [vmem:[#allocation5 + $0x40] sm:$0xff]
    %v48 = vld [vmem:[#allocation5 + $0x48] sm:$0xff]
    %v49 = vld [vmem:[#allocation5 + $0x50] sm:$0xff]
    %v50 = vld [vmem:[#allocation5 + $0x58] sm:$0xff]
    %v51 = vld [vmem:[#allocation5 + $0x60] sm:$0xff]
    %v52 = vld [vmem:[#allocation5 + $0x68] sm:$0xff]
    %v53 = vld [vmem:[#allocation5 + $0x70] sm:$0xff]
    %v54 = vld [vmem:[#allocation5 + $0x78] sm:$0xff]
    %vm55 = vcmask 261120
    %v57 = vsel %vm55, %v38, 0
    %v60 = vsel %vm55, %v39, 0
    %v63 = vsel %vm55, %v40, 0
    %v66 = vsel %vm55, %v41, 0
    %v69 = vsel %vm55, %v42, 0
    %v72 = vsel %vm55, %v43, 0
    %v75 = vsel %vm55, %v44, 0
    %v78 = vsel %vm55, %v45, 0
    %v81 = vsel %vm55, %v46, 0
    %v84 = vsel %vm55, %v47, 0
    %v87 = vsel %vm55, %v48, 0
    %v90 = vsel %vm55, %v49, 0
    %v93 = vsel %vm55, %v50, 0
    %v96 = vsel %vm55, %v51, 0
    %v99 = vsel %vm55, %v52, 0
    %v102 = vsel %vm55, %v53, 0
    %v105 = vsel %vm55, %v54, 0
    %107 = vmatprep.subr.mxu0 0.0
    %108 = vmatpush1.xpose.msra.mxu0 %v60
    %109 = vmatprep.subr.mxu0 0.0
    %110 = vmatpush1.xpose.msra.mxu0 %v63
    %111 = vmatprep.subr.mxu0 0.0
    %112 = vmatpush1.xpose.msra.mxu0 %v66
    %113 = vmatprep.subr.mxu0 0.0
    %114 = vmatpush1.xpose.msra.mxu0 %v69
    %115 = vmatprep.subr.mxu0 0.0
    %116 = vmatpush1.xpose.msra.mxu0 %v72
    %117 = vmatprep.subr.mxu0 0.0
    %118 = vmatpush1.xpose.msra.mxu0 %v75
    %119 = vmatprep.subr.mxu0 0.0
    %120 = vmatpush1.xpose.msra.mxu0 %v78
    %121 = vmatprep.subr.mxu0 0.0
    %122 = vmatpush1.xpose.msra.mxu0 %v81
    %123 = vmatprep.subr.mxu0 0.0
    %124 = vmatpush1.xpose.msra.mxu0 %v84
    %125 = vmatprep.subr.mxu0 0.0
    %126 = vmatpush1.xpose.msra.mxu0 %v87
    %127 = vmatprep.subr.mxu0 0.0
    %128 = vmatpush1.xpose.msra.mxu0 %v90
    %129 = vmatprep.subr.mxu0 0.0
    %130 = vmatpush1.xpose.msra.mxu0 %v93
    %131 = vmatprep.subr.mxu0 0.0
    %132 = vmatpush1.xpose.msra.mxu0 %v96
    %133 = vmatprep.subr.mxu0 0.0
    %134 = vmatpush1.xpose.msra.mxu0 %v99
    %135 = vmatprep.subr.mxu0 0.0
    %136 = vmatpush1.xpose.msra.mxu0 %v102
    %137 = vmatprep.subr.mxu0 0.0
    %138 = vmatpush1.xpose.msra.mxu0 %v105
    %139 = vmatprep.subr.mxu0 0.0
    %140 = vmatpush1.xpose.msra.mxu0 0.0
    %141 = vmatprep.subr.mxu0 0.0
    %142 = vmatpush1.xpose.msra.mxu0 0.0
    %143 = vmatprep.subr.mxu0 0.0
    %144 = vmatpush1.xpose.msra.mxu0 0.0
    %145 = vmatprep.subr.mxu0 0.0
    %146 = vmatpush1.xpose.msra.mxu0 0.0
    %147 = vmatprep.subr.mxu0 0.0
    %148 = vmatpush1.xpose.msra.mxu0 0.0
    %149 = vmatprep.subr.mxu0 0.0
    %150 = vmatpush1.xpose.msra.mxu0 0.0
    %151 = vmatprep.subr.mxu0 0.0
    %152 = vmatpush1.xpose.msra.mxu0 0.0
    %153 = vmatprep.subr.mxu0 0.0
    %154 = vmatpush1.xpose.msra.mxu0 0.0
    %155 = vmatprep.subr.mxu0 0.0
    %156 = vmatpush1.xpose.msra.mxu0 0.0
    %157 = vmatprep.subr.mxu0 0.0
    %158 = vmatpush1.xpose.msra.mxu0 0.0
    %159 = vmatprep.subr.mxu0 0.0
    %160 = vmatpush1.xpose.msra.mxu0 0.0
    %161 = vmatprep.subr.mxu0 0.0
    %162 = vmatpush1.xpose.msra.mxu0 0.0
    %163 = vmatprep.subr.mxu0 0.0
    %164 = vmatpush1.xpose.msra.mxu0 0.0
    %165 = vmatprep.subr.mxu0 0.0
    %166 = vmatpush1.xpose.msra.mxu0 0.0
    %167 = vmatprep.subr.mxu0 0.0
    %168 = vmatpush1.xpose.msra.mxu0 0.0
    %169 = vmatprep.subr.mxu0 0.0
    %170 = vmatpush1.xpose.msra.mxu0 0.0
    %171 = vmatprep.mubr.f32.mxu0 0.0
    %172 = vmatmul.mubr.f32.gmra.mrb[0].mxu0 %v57
    %v173 = vpop.f32.mrb[0].mxu0
    %v174 = vadd.f32 0.0, %v173
    %v175 = vpop.f32.mrb[0].mxu0
    %176 = vdwg.mxu0
    %177 = vst [vmem:[#allocation7] sm:$0x1] %v174
    // Predicated region
    $region18: #{tpu_custom_call.1} parent=1 // pred_check
      _
    $region19: #{tpu_custom_call.1} parent=1 // pred_check_branch
      %179 = sbr.rel (0) target = $region21
    $region20: #{tpu_custom_call.1} parent=1 // pred_region
      %s181 = ssub.s32 16, 16
      %182 = vsyncadd [#allocation4], %s181
      %s184 = sshll.u32 [#allocation7], 4
      %s185 = int_to_ptr.vmem [resolvable:$true] %s184
      %187 = dma.vmem_to_hbm [thread:$0]  %s185, 16, %s2, [#allocation4]
    $region21: #{tpu_custom_call.1} parent=1 // pred_fallthru
      _
    // Predicated region
    $region22: #{tpu_custom_call.1} parent=1 // pred_check
      _
    $region23: #{tpu_custom_call.1} parent=1 // pred_check_branch
      %189 = sbr.rel (0) target = $region25
    $region24: #{tpu_custom_call.1} parent=1 // pred_region
      %190 = dma.done [#allocation4], 16
    $region25: #{tpu_custom_call.1} parent=1 // pred_fallthru
      _
    %191 = vsyncpa [#allocation3], 1
    %192 = vsyncpa [#allocation6], 1
    %193 = vsyncpa [#allocation4], 1

</llo_original>
